<compile_context>
chip_gen: v5e
topology: v5e:2x2
jax: 0.10.0
libtpu: 0.0.40
codegen_flags: <defaults>
</compile_context>

<pallas_src>
import functools

import jax
import jax.numpy as jnp
from jax.experimental import pallas as pl
from jax.experimental.pallas import tpu as pltpu

_LANE = 128     # vreg lane width (last dim)
_SUBLANE = 8    # f32 sublane height (second-to-last dim)


def _round_up(x: int, m: int) -> int:
    return (x + m - 1) // m * m


def _largest_divisor_tile(dim: int, cap: int, quantum: int) -> int:
    """Largest multiple of `quantum` that divides `dim` and is <= max(cap, quantum)."""
    t = max(quantum, min(cap, dim))
    t = (t // quantum) * quantum
    while dim % t:
        t -= quantum
    return t


def _vmem_budget_bytes() -> int:
    """Per-generation VMEM budget with headroom (v7x 64 MiB vs v5e/v6e 128 MiB)."""
    try:
        cap = int(pltpu.get_tpu_info().vmem_capacity_bytes)
    except Exception:
        cap = 64 * 1024 * 1024  # conservative default (v7x per-core VMEM)
    return int(cap * 0.85)


# ---------------------------------------------------------------------------
# Parameter preparation (runs ONCE, outside the per-call hot path).
# ---------------------------------------------------------------------------
def prepare_params(params, weight_dtype=jnp.bfloat16):
    """Pad (F_in, F_out) weights / (F_out,) biases to 128-lane multiples and
    cast weights to bf16. Returns [(w_pad, b_pad, f_in, f_out), ...]."""
    prepared = []
    for w, b in params:
        fi, fo = int(w.shape[0]), int(w.shape[1])
        fi_p, fo_p = _round_up(fi, _LANE), _round_up(fo, _LANE)
        w_pad = jnp.zeros((fi_p, fo_p), weight_dtype).at[:fi, :fo].set(
            w.astype(weight_dtype))
        b_pad = jnp.zeros((1, fo_p), jnp.float32).at[0, :fo].set(
            b.astype(jnp.float32))
        prepared.append((w_pad, b_pad, fi, fo))
    return prepared


# ---------------------------------------------------------------------------
# Fused whole-network kernel (all weights resident in VMEM).
# ---------------------------------------------------------------------------
def _fused_mlp_kernel(*refs, num_layers: int):
    """refs = (x_ref, w1, b1, ..., wL, bL, o_ref); all blocks VMEM-resident.

    Layer 0 is applied to raw x; every subsequent layer is ReLU -> Linear,
    mirroring SimpleNN.forward. Intermediates never leave vregs/VMEM.
    """
    x_ref = refs[0]
    o_ref = refs[1 + 2 * num_layers]

    h = x_ref[...]                                   # f32 activations
    for layer in range(num_layers):
        w = refs[1 + 2 * layer][...]                 # bf16 weights
        b = refs[2 + 2 * layer][...]                 # f32 bias (1, F_out)
        if layer > 0:
            h = jnp.maximum(h, 0.0)                  # ReLU in f32 (VPU)
        h = jnp.dot(h.astype(jnp.bfloat16), w,       # MXU bf16, f32 accumulate
                    preferred_element_type=jnp.float32) + b
    o_ref[...] = h.astype(o_ref.dtype)


def _fused_forward(x_pad, prepared, TB, vmem_limit, single_buffer_weights):
    B_pad, fi0_p = x_pad.shape
    num_layers = len(prepared)
    fo_last_p = int(prepared[-1][0].shape[1])

    wb_kwargs = (dict(pipeline_mode=pl.Buffered(1))
                 if single_buffer_weights else {})

    in_specs = [pl.BlockSpec((TB, fi0_p), lambda i: (i, 0))]
    flat_wb = []
    flops = 0
    bytes_accessed = int(x_pad.size) * 4 + B_pad * fo_last_p * 4
    for (w_pad, b_pad, _, _) in prepared:
        fi_p, fo_p = int(w_pad.shape[0]), int(w_pad.shape[1])
        # Grid-invariant blocks: constant index_map keeps them resident.
        in_specs.append(pl.BlockSpec((fi_p, fo_p), lambda i: (0, 0), **wb_kwargs))
        in_specs.append(pl.BlockSpec((1, fo_p), lambda i: (0, 0), **wb_kwargs))
        flat_wb += [w_pad, b_pad]
        flops += 2 * B_pad * fi_p * fo_p
        bytes_accessed += fi_p * fo_p * 2 + fo_p * 4

    return pl.pallas_call(
        functools.partial(_fused_mlp_kernel, num_layers=num_layers),
        out_shape=jax.ShapeDtypeStruct((B_pad, fo_last_p), jnp.float32),
        grid=(B_pad // TB,),
        in_specs=in_specs,
        out_specs=pl.BlockSpec((TB, fo_last_p), lambda i: (i, 0)),
        compiler_params=pltpu.CompilerParams(
            dimension_semantics=("parallel",),   # batch tiles shard across TCs
            vmem_limit_bytes=int(vmem_limit)),
        cost_estimate=pl.CostEstimate(
            flops=int(flops), transcendentals=0,
            bytes_accessed=int(bytes_accessed)),
    )(x_pad, *flat_wb)


# ---------------------------------------------------------------------------
# Per-layer tiled fallback (for layers too large to keep resident in VMEM).
# ---------------------------------------------------------------------------
def _tiled_layer_kernel(x_ref, w_ref, b_ref, o_ref, acc_ref, *, apply_relu: bool):
    @pl.when(pl.program_id(2) == 0)
    def _():
        acc_ref[...] = jnp.zeros_like(acc_ref)

    a = x_ref[...]
    if apply_relu:
        a = jnp.maximum(a, 0.0)
    acc_ref[...] += jnp.dot(a.astype(jnp.bfloat16), w_ref[...],
                            preferred_element_type=jnp.float32)

    @pl.when(pl.program_id(2) == pl.num_programs(2) - 1)
    def _():
        o_ref[...] = (acc_ref[...] + b_ref[...]).astype(o_ref.dtype)


def _tiled_layer(x, w_pad, b_pad, apply_relu, vmem_limit):
    M, K = int(x.shape[0]), int(x.shape[1])
    N = int(w_pad.shape[1])
    tm = _largest_divisor_tile(M, 256, _SUBLANE)
    tk = _largest_divisor_tile(K, 512, _LANE)
    tn = _largest_divisor_tile(N, 512, _LANE)
    grid = (M // tm, N // tn, K // tk)
    return pl.pallas_call(
        functools.partial(_tiled_layer_kernel, apply_relu=apply_relu),
        out_shape=jax.ShapeDtypeStruct((M, N), jnp.float32),
        grid=grid,
        in_specs=[
            pl.BlockSpec((tm, tk), lambda i, j, k: (i, k)),
            pl.BlockSpec((tk, tn), lambda i, j, k: (k, j)),
            pl.BlockSpec((1, tn), lambda i, j, k: (0, j)),
        ],
        out_specs=pl.BlockSpec((tm, tn), lambda i, j, k: (i, j)),
        scratch_shapes=[pltpu.VMEM((tm, tn), jnp.float32)],
        compiler_params=pltpu.CompilerParams(
            dimension_semantics=("parallel", "parallel", "arbitrary"),
            vmem_limit_bytes=int(vmem_limit)),
        cost_estimate=pl.CostEstimate(
            flops=2 * M * K * N, transcendentals=0,
            bytes_accessed=M * K * 4 + K * N * 2 + N * 4 + M * N * 4),
    )(x, w_pad, b_pad)


# ---------------------------------------------------------------------------
# Forward pass wrapper.
# ---------------------------------------------------------------------------
def simple_nn_forward(x, prepared, *, force_tiled: bool = False):
    """SimpleNN forward. x: (B, F_in) f32; prepared: output of prepare_params."""
    B, fin = int(x.shape[0]), int(x.shape[1])
    assert fin == prepared[0][2], "x feature dim does not match layer 0"
    fi0_p = int(prepared[0][0].shape[0])
    fo_last = prepared[-1][3]
    fo_last_p = int(prepared[-1][0].shape[1])

    budget = _vmem_budget_bytes()

    # Resident (single-buffered) weight/bias footprint for the fused path.
    weight_bytes = sum(int(w.size) * w.dtype.itemsize + int(b.size) * 4
                       for w, b, _, _ in prepared)

    # Per-batch-row VMEM for streamed / intermediate activations
    # (x/out f32 double-buffered, intermediates + bf16 cast copies), over-estimated.
    dims_pad = [fi0_p] + [int(w.shape[1]) for w, _, _, _ in prepared]
    per_row = 4 * (2 * dims_pad[0] + 2 * dims_pad[-1]
                   + sum(dims_pad[1:-1]) + max(dims_pad))

    use_fused = (not force_tiled) and (weight_bytes <= budget // 3)

    if use_fused:
        # Batch tile: as large as the VMEM budget allows (cap 512), split into
        # >= 2 tiles whenever B allows so both v7x TensorCores get work, and
        # exactly B when B is already aligned (no x pad / no output slice).
        tb_cap = max(_SUBLANE,
                     min(512, ((budget - weight_bytes) // per_row)
                         // _SUBLANE * _SUBLANE))
        B8 = _round_up(B, _SUBLANE)
        if B8 <= tb_cap:
            TB = B8 // 2 if (B8 % 16 == 0 and B8 >= 16) else B8
        else:
            TB = tb_cap
        B_pad = _round_up(B8, TB)

        vmem_limit = min(budget,
                         max(32 * 1024 * 1024, weight_bytes + 3 * TB * per_row))

        if B_pad == B and fi0_p == fin:
            x_pad = x.astype(jnp.float32)           # aligned: no copy/pad op
        else:
            x_pad = jnp.zeros((B_pad, fi0_p), jnp.float32).at[:B, :fin].set(x)

        try:
            out_pad = _fused_forward(x_pad, prepared, TB, vmem_limit,
                                     single_buffer_weights=True)
        except Exception:
            # Some JAX versions reject pipeline_mode=Buffered(1); fall back to
            # default (double) buffering of the resident weight blocks.
            out_pad = _fused_forward(x_pad, prepared, TB, vmem_limit,
                                     single_buffer_weights=False)
    else:
        # Per-layer tiled fallback: weights streamed over an M/N/K grid.
        B_pad = _round_up(B, _SUBLANE)
        if B_pad == B and fi0_p == fin:
            h = x.astype(jnp.float32)
        else:
            h = jnp.zeros((B_pad, fi0_p), jnp.float32).at[:B, :fin].set(x)
        for idx, (w_pad, b_pad, _, _) in enumerate(prepared):
            h = _tiled_layer(h, w_pad, b_pad, apply_relu=(idx > 0),
                             vmem_limit=budget)
        out_pad = h

    if B_pad == B and fo_last_p == fo_last:
        return out_pad
    return out_pad[:B, :fo_last]


def init_simple_nn_params(key, input_size, hidden_sizes, output_size=None):
    """Deterministic init matching nn.Linear's U(-1/sqrt(fan_in), 1/sqrt(fan_in)).
    Weights stored as (F_in, F_out) == torch_weight.T."""
    sizes = list(hidden_sizes) + ([output_size] if output_size is not None else [])
    params = []
    prev = input_size
    for size in sizes:
        key, kw, kb = jax.random.split(key, 3)
        bound = 1.0 / jnp.sqrt(jnp.float32(prev))
        w = jax.random.uniform(kw, (prev, size), jnp.float32, -bound, bound)
        b = jax.random.uniform(kb, (size,), jnp.float32, -bound, bound)
        params.append((w, b))
        prev = size
    return params


if __name__ == "__main__":
    key = jax.random.PRNGKey(0)
    k_x, k_p, k_x2, k_p2 = jax.random.split(key, 4)

    # ----- Case 1: unaligned toy shapes (exercises padding + fused path) -----
    batch, input_size, hidden_sizes, output_size = 8, 32, [64, 32], 16
    x = jax.random.normal(k_x, (batch, input_size), dtype=jnp.float32)
    params = init_simple_nn_params(k_p, input_size, hidden_sizes, output_size)
    prepared = prepare_params(params)

    out = simple_nn_forward(x, prepared)
    jax.block_until_ready(out)
    assert out.shape == (batch, output_size)

    def ref_f32(x, params):
        h = x @ params[0][0] + params[0][1]
        for w, b in params[1:]:
            h = jnp.maximum(h, 0.0) @ w + b
        return h

    def ref_bf16(x, params):  # same math the kernel does (bf16 operands, f32 acc)
        h = x
        for i, (w, b) in enumerate(params):
            if i > 0:
                h = jnp.maximum(h, 0.0)
            h = jnp.dot(h.astype(jnp.bfloat16), w.astype(jnp.bfloat16),
                        preferred_element_type=jnp.float32) + b
        return h

    r_bf = ref_bf16(x, params)
    r_32 = ref_f32(x, params)
    assert jnp.allclose(out, r_bf, atol=2e-3, rtol=2e-3), (
        float(jnp.max(jnp.abs(out - r_bf))))
    assert jnp.allclose(out, r_32, atol=5e-2, rtol=5e-2), (
        float(jnp.max(jnp.abs(out - r_32))))

    # ----- Case 2: aligned shapes (no pad / no slice, 2 batch tiles for v7x) --
    b2, i2, h2, o2 = 16, 128, [128], 128
    x2 = jax.random.normal(k_x2, (b2, i2), dtype=jnp.float32)
    params2 = init_simple_nn_params(k_p2, i2, h2, o2)
    prepared2 = prepare_params(params2)
    out2 = simple_nn_forward(x2, prepared2)
    jax.block_until_ready(out2)
    assert out2.shape == (b2, o2)
    assert jnp.allclose(out2, ref_bf16(x2, params2), atol=2e-3, rtol=2e-3)

    # ----- Case 3: force the tiled per-layer fallback path and cross-check ---
    out3 = simple_nn_forward(x, prepared, force_tiled=True)
    jax.block_until_ready(out3)
    assert jnp.allclose(out3, out, atol=2e-3, rtol=2e-3), (
        float(jnp.max(jnp.abs(out3 - out))))

    print("KERNEL_OK")
</pallas_src>

<mosaic_0001>
module attributes {stable_mosaic.version = 11 : i64} {
  func.func @_fused_mlp_kernel(%arg0: i32, %arg1: memref<8x128xf32, #tpu.memory_space<vmem>>, %arg2: memref<128x128xbf16, #tpu.memory_space<vmem>>, %arg3: memref<1x128xf32, #tpu.memory_space<vmem>>, %arg4: memref<128x128xbf16, #tpu.memory_space<vmem>>, %arg5: memref<1x128xf32, #tpu.memory_space<vmem>>, %arg6: memref<128x128xbf16, #tpu.memory_space<vmem>>, %arg7: memref<1x128xf32, #tpu.memory_space<vmem>>, %arg8: memref<8x128xf32, #tpu.memory_space<vmem>>) attributes {dimension_semantics = [#tpu.dimension_semantics<parallel>], iteration_bounds = array<i64: 1>, scalar_prefetch = 0 : i64, scratch_operands = 0 : i64, tpu.core_type = #tpu.core_type<tc>, window_params = [{transform_indices = @transform_0, window_bounds = array<i64: 8, 128>}, {pipeline_mode = #tpu.pipeline_mode<synchronous>, transform_indices = @transform_1, window_bounds = array<i64: 128, 128>}, {pipeline_mode = #tpu.pipeline_mode<synchronous>, transform_indices = @transform_2, window_bounds = array<i64: 1, 128>}, {pipeline_mode = #tpu.pipeline_mode<synchronous>, transform_indices = @transform_3, window_bounds = array<i64: 128, 128>}, {pipeline_mode = #tpu.pipeline_mode<synchronous>, transform_indices = @transform_4, window_bounds = array<i64: 1, 128>}, {pipeline_mode = #tpu.pipeline_mode<synchronous>, transform_indices = @transform_5, window_bounds = array<i64: 128, 128>}, {pipeline_mode = #tpu.pipeline_mode<synchronous>, transform_indices = @transform_6, window_bounds = array<i64: 1, 128>}, {transform_indices = @transform_7, window_bounds = array<i64: 8, 128>}]} {
    %c0 = arith.constant 0 : index
    %c0_0 = arith.constant 0 : index
    %0 = vector.load %arg1[%c0, %c0_0] : memref<8x128xf32, #tpu.memory_space<vmem>>, vector<8x128xf32>
    %c0_1 = arith.constant 0 : index
    %c0_2 = arith.constant 0 : index
    %1 = vector.load %arg2[%c0_1, %c0_2] : memref<128x128xbf16, #tpu.memory_space<vmem>>, vector<128x128xbf16>
    %c0_3 = arith.constant 0 : index
    %c0_4 = arith.constant 0 : index
    %2 = vector.load %arg3[%c0_3, %c0_4] : memref<1x128xf32, #tpu.memory_space<vmem>>, vector<1x128xf32>
    %3 = arith.truncf %0 : vector<8x128xf32> to vector<8x128xbf16>
    %cst = arith.constant dense<0.000000e+00> : vector<8x128xf32>
    %4 = tpu.matmul %3, %1, %cst {dimension_numbers = #tpu.dot_dimension_numbers<[1], [0], [0], [1], [0, 0, 1, 1], [], []>} : vector<8x128xbf16>, vector<128x128xbf16>, vector<8x128xf32> -> vector<8x128xf32>
    %5 = vector.broadcast %2 : vector<1x128xf32> to vector<8x128xf32>
    %6 = arith.addf %4, %5 : vector<8x128xf32>
    %c0_5 = arith.constant 0 : index
    %c0_6 = arith.constant 0 : index
    %7 = vector.load %arg4[%c0_5, %c0_6] : memref<128x128xbf16, #tpu.memory_space<vmem>>, vector<128x128xbf16>
    %c0_7 = arith.constant 0 : index
    %c0_8 = arith.constant 0 : index
    %8 = vector.load %arg5[%c0_7, %c0_8] : memref<1x128xf32, #tpu.memory_space<vmem>>, vector<1x128xf32>
    %cst_9 = arith.constant 0.000000e+00 : f32
    %9 = vector.broadcast %cst_9 : f32 to vector<8x128xf32>
    %10 = arith.maximumf %6, %9 : vector<8x128xf32>
    %11 = arith.truncf %10 : vector<8x128xf32> to vector<8x128xbf16>
    %cst_10 = arith.constant dense<0.000000e+00> : vector<8x128xf32>
    %12 = tpu.matmul %11, %7, %cst_10 {dimension_numbers = #tpu.dot_dimension_numbers<[1], [0], [0], [1], [0, 0, 1, 1], [], []>} : vector<8x128xbf16>, vector<128x128xbf16>, vector<8x128xf32> -> vector<8x128xf32>
    %13 = vector.broadcast %8 : vector<1x128xf32> to vector<8x128xf32>
    %14 = arith.addf %12, %13 : vector<8x128xf32>
    %c0_11 = arith.constant 0 : index
    %c0_12 = arith.constant 0 : index
    %15 = vector.load %arg6[%c0_11, %c0_12] : memref<128x128xbf16, #tpu.memory_space<vmem>>, vector<128x128xbf16>
    %c0_13 = arith.constant 0 : index
    %c0_14 = arith.constant 0 : index
    %16 = vector.load %arg7[%c0_13, %c0_14] : memref<1x128xf32, #tpu.memory_space<vmem>>, vector<1x128xf32>
    %cst_15 = arith.constant 0.000000e+00 : f32
    %17 = vector.broadcast %cst_15 : f32 to vector<8x128xf32>
    %18 = arith.maximumf %14, %17 : vector<8x128xf32>
    %19 = arith.truncf %18 : vector<8x128xf32> to vector<8x128xbf16>
    %cst_16 = arith.constant dense<0.000000e+00> : vector<8x128xf32>
    %20 = tpu.matmul %19, %15, %cst_16 {dimension_numbers = #tpu.dot_dimension_numbers<[1], [0], [0], [1], [0, 0, 1, 1], [], []>} : vector<8x128xbf16>, vector<128x128xbf16>, vector<8x128xf32> -> vector<8x128xf32>
    %21 = vector.broadcast %16 : vector<1x128xf32> to vector<8x128xf32>
    %22 = arith.addf %20, %21 : vector<8x128xf32>
    %c0_17 = arith.constant 0 : index
    %c0_18 = arith.constant 0 : index
    %23 = vector.load %arg8[%c0_17, %c0_18] : memref<8x128xf32, #tpu.memory_space<vmem>>, vector<8x128xf32>
    tpu.vector_store %arg8[%c0_17, %c0_18], %22 {strides = array<i32>} : memref<8x128xf32, #tpu.memory_space<vmem>>, vector<8x128xf32>,
    return
  }
  func.func @transform_0(%arg0: i32) -> (i32, i32) {
    %c0_i32 = arith.constant 0 : i32
    %c0_i32_0 = arith.constant 0 : i32
    return %arg0, %c0_i32 : i32, i32
  }
  func.func @transform_1(%arg0: i32) -> (i32, i32) {
    %c0_i32 = arith.constant 0 : i32
    %c0_i32_0 = arith.constant 0 : i32
    %c0_i32_1 = arith.constant 0 : i32
    return %c0_i32, %c0_i32_0 : i32, i32
  }
  func.func @transform_2(%arg0: i32) -> (i32, i32) {
    %c0_i32 = arith.constant 0 : i32
    %c0_i32_0 = arith.constant 0 : i32
    %c0_i32_1 = arith.constant 0 : i32
    return %c0_i32, %c0_i32_0 : i32, i32
  }
  func.func @transform_3(%arg0: i32) -> (i32, i32) {
    %c0_i32 = arith.constant 0 : i32
    %c0_i32_0 = arith.constant 0 : i32
    %c0_i32_1 = arith.constant 0 : i32
    return %c0_i32, %c0_i32_0 : i32, i32
  }
  func.func @transform_4(%arg0: i32) -> (i32, i32) {
    %c0_i32 = arith.constant 0 : i32
    %c0_i32_0 = arith.constant 0 : i32
    %c0_i32_1 = arith.constant 0 : i32
    return %c0_i32, %c0_i32_0 : i32, i32
  }
  func.func @transform_5(%arg0: i32) -> (i32, i32) {
    %c0_i32 = arith.constant 0 : i32
    %c0_i32_0 = arith.constant 0 : i32
    %c0_i32_1 = arith.constant 0 : i32
    return %c0_i32, %c0_i32_0 : i32, i32
  }
  func.func @transform_6(%arg0: i32) -> (i32, i32) {
    %c0_i32 = arith.constant 0 : i32
    %c0_i32_0 = arith.constant 0 : i32
    %c0_i32_1 = arith.constant 0 : i32
    return %c0_i32, %c0_i32_0 : i32, i32
  }
  func.func @transform_7(%arg0: i32) -> (i32, i32) {
    %c0_i32 = arith.constant 0 : i32
    %c0_i32_0 = arith.constant 0 : i32
    return %arg0, %c0_i32 : i32, i32
  }
}

module attributes {stable_mosaic.version = 11 : i64} {
  func.func @_fused_mlp_kernel(%arg0: i32, %arg1: memref<8x128xf32, #tpu.memory_space<vmem>>, %arg2: memref<128x128xbf16, #tpu.memory_space<vmem>>, %arg3: memref<1x128xf32, #tpu.memory_space<vmem>>, %arg4: memref<128x128xbf16, #tpu.memory_space<vmem>>, %arg5: memref<1x128xf32, #tpu.memory_space<vmem>>, %arg6: memref<128x128xbf16, #tpu.memory_space<vmem>>, %arg7: memref<1x128xf32, #tpu.memory_space<vmem>>, %arg8: memref<8x128xf32, #tpu.memory_space<vmem>>) attributes {dimension_semantics = [#tpu.dimension_semantics<parallel>], iteration_bounds = array<i64: 1>, scalar_prefetch = 0 : i64, scratch_operands = 0 : i64, tpu.core_type = #tpu.core_type<tc>, window_params = [{transform_indices = @transform_0, window_bounds = array<i64: 8, 128>}, {pipeline_mode = #tpu.pipeline_mode<synchronous>, transform_indices = @transform_1, window_bounds = array<i64: 128, 128>}, {pipeline_mode = #tpu.pipeline_mode<synchronous>, transform_indices = @transform_2, window_bounds = array<i64: 1, 128>}, {pipeline_mode = #tpu.pipeline_mode<synchronous>, transform_indices = @transform_3, window_bounds = array<i64: 128, 128>}, {pipeline_mode = #tpu.pipeline_mode<synchronous>, transform_indices = @transform_4, window_bounds = array<i64: 1, 128>}, {pipeline_mode = #tpu.pipeline_mode<synchronous>, transform_indices = @transform_5, window_bounds = array<i64: 128, 128>}, {pipeline_mode = #tpu.pipeline_mode<synchronous>, transform_indices = @transform_6, window_bounds = array<i64: 1, 128>}, {transform_indices = @transform_7, window_bounds = array<i64: 8, 128>}]} {
    %c0 = arith.constant 0 : index
    %c0_0 = arith.constant 0 : index
    %0 = vector.load %arg1[%c0, %c0_0] : memref<8x128xf32, #tpu.memory_space<vmem>>, vector<8x128xf32>
    %c0_1 = arith.constant 0 : index
    %c0_2 = arith.constant 0 : index
    %1 = vector.load %arg2[%c0_1, %c0_2] : memref<128x128xbf16, #tpu.memory_space<vmem>>, vector<128x128xbf16>
    %c0_3 = arith.constant 0 : index
    %c0_4 = arith.constant 0 : index
    %2 = vector.load %arg3[%c0_3, %c0_4] : memref<1x128xf32, #tpu.memory_space<vmem>>, vector<1x128xf32>
    %3 = arith.truncf %0 : vector<8x128xf32> to vector<8x128xbf16>
    %cst = arith.constant dense<0.000000e+00> : vector<8x128xf32>
    %4 = tpu.matmul %3, %1, %cst {dimension_numbers = #tpu.dot_dimension_numbers<[1], [0], [0], [1], [0, 0, 1, 1], [], []>} : vector<8x128xbf16>, vector<128x128xbf16>, vector<8x128xf32> -> vector<8x128xf32>
    %5 = vector.broadcast %2 : vector<1x128xf32> to vector<8x128xf32>
    %6 = arith.addf %4, %5 : vector<8x128xf32>
    %c0_5 = arith.constant 0 : index
    %c0_6 = arith.constant 0 : index
    %7 = vector.load %arg4[%c0_5, %c0_6] : memref<128x128xbf16, #tpu.memory_space<vmem>>, vector<128x128xbf16>
    %c0_7 = arith.constant 0 : index
    %c0_8 = arith.constant 0 : index
    %8 = vector.load %arg5[%c0_7, %c0_8] : memref<1x128xf32, #tpu.memory_space<vmem>>, vector<1x128xf32>
    %cst_9 = arith.constant 0.000000e+00 : f32
    %9 = vector.broadcast %cst_9 : f32 to vector<8x128xf32>
    %10 = arith.maximumf %6, %9 : vector<8x128xf32>
    %11 = arith.truncf %10 : vector<8x128xf32> to vector<8x128xbf16>
    %cst_10 = arith.constant dense<0.000000e+00> : vector<8x128xf32>
    %12 = tpu.matmul %11, %7, %cst_10 {dimension_numbers = #tpu.dot_dimension_numbers<[1], [0], [0], [1], [0, 0, 1, 1], [], []>} : vector<8x128xbf16>, vector<128x128xbf16>, vector<8x128xf32> -> vector<8x128xf32>
    %13 = vector.broadcast %8 : vector<1x128xf32> to vector<8x128xf32>
    %14 = arith.addf %12, %13 : vector<8x128xf32>
    %c0_11 = arith.constant 0 : index
    %c0_12 = arith.constant 0 : index
    %15 = vector.load %arg6[%c0_11, %c0_12] : memref<128x128xbf16, #tpu.memory_space<vmem>>, vector<128x128xbf16>
    %c0_13 = arith.constant 0 : index
    %c0_14 = arith.constant 0 : index
    %16 = vector.load %arg7[%c0_13, %c0_14] : memref<1x128xf32, #tpu.memory_space<vmem>>, vector<1x128xf32>
    %cst_15 = arith.constant 0.000000e+00 : f32
    %17 = vector.broadcast %cst_15 : f32 to vector<8x128xf32>
    %18 = arith.maximumf %14, %17 : vector<8x128xf32>
    %19 = arith.truncf %18 : vector<8x128xf32> to vector<8x128xbf16>
    %cst_16 = arith.constant dense<0.000000e+00> : vector<8x128xf32>
    %20 = tpu.matmul %19, %15, %cst_16 {dimension_numbers = #tpu.dot_dimension_numbers<[1], [0], [0], [1], [0, 0, 1, 1], [], []>} : vector<8x128xbf16>, vector<128x128xbf16>, vector<8x128xf32> -> vector<8x128xf32>
    %21 = vector.broadcast %16 : vector<1x128xf32> to vector<8x128xf32>
    %22 = arith.addf %20, %21 : vector<8x128xf32>
    %c0_17 = arith.constant 0 : index
    %c0_18 = arith.constant 0 : index
    %23 = vector.load %arg8[%c0_17, %c0_18] : memref<8x128xf32, #tpu.memory_space<vmem>>, vector<8x128xf32>
    tpu.vector_store %arg8[%c0_17, %c0_18], %22 {strides = array<i32>} : memref<8x128xf32, #tpu.memory_space<vmem>>, vector<8x128xf32>,
    return
  }
  func.func @transform_0(%arg0: i32) -> (i32, i32) {
    %c0_i32 = arith.constant 0 : i32
    %c0_i32_0 = arith.constant 0 : i32
    return %arg0, %c0_i32 : i32, i32
  }
  func.func @transform_1(%arg0: i32) -> (i32, i32) {
    %c0_i32 = arith.constant 0 : i32
    %c0_i32_0 = arith.constant 0 : i32
    %c0_i32_1 = arith.constant 0 : i32
    return %c0_i32, %c0_i32_0 : i32, i32
  }
  func.func @transform_2(%arg0: i32) -> (i32, i32) {
    %c0_i32 = arith.constant 0 : i32
    %c0_i32_0 = arith.constant 0 : i32
    %c0_i32_1 = arith.constant 0 : i32
    return %c0_i32, %c0_i32_0 : i32, i32
  }
  func.func @transform_3(%arg0: i32) -> (i32, i32) {
    %c0_i32 = arith.constant 0 : i32
    %c0_i32_0 = arith.constant 0 : i32
    %c0_i32_1 = arith.constant 0 : i32
    return %c0_i32, %c0_i32_0 : i32, i32
  }
  func.func @transform_4(%arg0: i32) -> (i32, i32) {
    %c0_i32 = arith.constant 0 : i32
    %c0_i32_0 = arith.constant 0 : i32
    %c0_i32_1 = arith.constant 0 : i32
    return %c0_i32, %c0_i32_0 : i32, i32
  }
  func.func @transform_5(%arg0: i32) -> (i32, i32) {
    %c0_i32 = arith.constant 0 : i32
    %c0_i32_0 = arith.constant 0 : i32
    %c0_i32_1 = arith.constant 0 : i32
    return %c0_i32, %c0_i32_0 : i32, i32
  }
  func.func @transform_6(%arg0: i32) -> (i32, i32) {
    %c0_i32 = arith.constant 0 : i32
    %c0_i32_0 = arith.constant 0 : i32
    %c0_i32_1 = arith.constant 0 : i32
    return %c0_i32, %c0_i32_0 : i32, i32
  }
  func.func @transform_7(%arg0: i32) -> (i32, i32) {
    %c0_i32 = arith.constant 0 : i32
    %c0_i32_0 = arith.constant 0 : i32
    return %arg0, %c0_i32 : i32, i32
  }
}

</mosaic_0001>

<llo_original>
// kernel: tpu_custom_call.1
$region0: #{tpu_custom_call.1}
  #allocation0 [shape = 'u32[]', space=smem, size = 0x4, offset = 0x4, fixed_abs, tag = 'smem constant byte address 0x4 - core index']
  #allocation1 [shape = 'u32[72,128]{1,0:T(1,128)}', space=vmem, size = 0x9000, scoped, tag = 'internal scratch']
  %s0 = inlined_call_operand.hbm [shape: f32[8,128], index: 0, kind: input, shape index: {}]
  %s1 = inlined_call_operand.hbm [shape: bf16[128,128], index: 1, kind: input, shape index: {}]
  %s2 = inlined_call_operand.vmem [shape: f32[1,128], index: 2, kind: input, shape index: {}]
  %s3 = inlined_call_operand.hbm [shape: bf16[128,128], index: 3, kind: input, shape index: {}]
  %s4 = inlined_call_operand.vmem [shape: f32[1,128], index: 4, kind: input, shape index: {}]
  %s5 = inlined_call_operand.hbm [shape: bf16[128,128], index: 5, kind: input, shape index: {}]
  %s6 = inlined_call_operand.vmem [shape: f32[1,128], index: 6, kind: input, shape index: {}]
  %s7 = inlined_call_operand.hbm [shape: f32[8,128], index: 7, kind: output, shape index: {}]
  %s8 = sld [smem:[#allocation0]]
  $region54: #{tpu_custom_call.1} parent=0
    _
  %s10 = ssub.s32 1, %s8
  %s11 = scalar_select 0, %s10, %s8
  $region1: #{tpu_custom_call.1} parent=0
    #allocation2 [shape = 'u8[4096]{0}', space=vmem, size = 0x1000, scoped, tag = 'input window, operand 0, single buffered']
    #allocation3 [shape = 's32[1]{0}', space=sflag, size = 0x4, scoped, tag = 'scoped memory for tpu_custom_call.1']
    #allocation4 [shape = 's32[1]{0}', space=sflag, size = 0x4, scoped, tag = 'scoped memory for tpu_custom_call.1']
    #allocation5 [shape = 'u8[32768]{0}', space=vmem, size = 0x8000, scoped, tag = 'input window, operand 1, single buffered']
    #allocation6 [shape = 's32[1]{0}', space=sflag, size = 0x4, scoped, tag = 'scoped memory for tpu_custom_call.1']
    #allocation7 [shape = 'u8[32768]{0}', space=vmem, size = 0x8000, scoped, tag = 'input window, operand 3, single buffered']
    #allocation8 [shape = 'u8[32768]{0}', space=vmem, size = 0x8000, scoped, tag = 'input window, operand 5, single buffered']
    #allocation9 [shape = 's32[1]{0}', space=sflag, size = 0x4, scoped, tag = 'scoped memory for tpu_custom_call.1']
    #allocation10 [shape = 'u8[4096]{0}', space=vmem, size = 0x1000, scoped, tag = 'output window, operand 0, single buffered']
    %12 = vsyncpa [#allocation3], 0
    %13 = vsyncpa [#allocation6], 0
    %14 = vsyncpa [#allocation9], 0
    %15 = vsyncpa [#allocation4], 0
    // Predicated region
    $region2: #{tpu_custom_call.1} parent=1 // pred_check
      _
    $region3: #{tpu_custom_call.1} parent=1 // pred_check_branch
      %17 = sbr.rel (0) target = $region5
    $region4: #{tpu_custom_call.1} parent=1 // pred_region
      %19 = vsyncadd [#allocation3], 0
      %s21 = sshll.u32 %s0, 4
      %s22 = int_to_ptr.hbm [resolvable:$true] %s21
      %s23 = sshll.u32 [#allocation2], 4
      %s24 = int_to_ptr.vmem [resolvable:$true] %s23
      %26 = dma.hbm_to_vmem [thread:$0]  %s22, 128, %s24, [#allocation3]
    $region5: #{tpu_custom_call.1} parent=1 // pred_fallthru
      _
    // Predicated region
    $region6: #{tpu_custom_call.1} parent=1 // pred_check
      _
    $region7: #{tpu_custom_call.1} parent=1 // pred_check_branch
      %28 = sbr.rel (0) target = $region9
    $region8: #{tpu_custom_call.1} parent=1 // pred_region
      %30 = vsyncadd [#allocation6], 0
      %s31 = sshll.u32 %s1, 4
      %s32 = int_to_ptr.hbm [resolvable:$true] %s31
      %s33 = sshll.u32 [#allocation5], 4
      %s34 = int_to_ptr.vmem [resolvable:$true] %s33
      %39 = dma.hbm_to_vmem [thread:$0]  %s32, 1024, %s34, [#allocation6], 64, 64, 4
    $region9: #{tpu_custom_call.1} parent=1 // pred_fallthru
      _
    // Predicated region
    $region10: #{tpu_custom_call.1} parent=1 // pred_check
      _
    $region11: #{tpu_custom_call.1} parent=1 // pred_check_branch
      %41 = sbr.rel (0) target = $region13
    $region12: #{tpu_custom_call.1} parent=1 // pred_region
      _
    $region13: #{tpu_custom_call.1} parent=1 // pred_fallthru
      _
    // Predicated region
    $region14: #{tpu_custom_call.1} parent=1 // pred_check
      _
    $region15: #{tpu_custom_call.1} parent=1 // pred_check_branch
      %43 = sbr.rel (0) target = $region17
    $region16: #{tpu_custom_call.1} parent=1 // pred_region
      %45 = vsyncadd [#allocation6], 0
      %s46 = sshll.u32 %s3, 4
      %s47 = int_to_ptr.hbm [resolvable:$true] %s46
      %s48 = sshll.u32 [#allocation7], 4
      %s49 = int_to_ptr.vmem [resolvable:$true] %s48
      %54 = dma.hbm_to_vmem [thread:$0]  %s47, 1024, %s49, [#allocation6], 64, 64, 4
    $region17: #{tpu_custom_call.1} parent=1 // pred_fallthru
      _
    // Predicated region
    $region18: #{tpu_custom_call.1} parent=1 // pred_check
      _
    $region19: #{tpu_custom_call.1} parent=1 // pred_check_branch
      %56 = sbr.rel (0) target = $region21
    $region20: #{tpu_custom_call.1} parent=1 // pred_region
      _
    $region21: #{tpu_custom_call.1} parent=1 // pred_fallthru
      _
    // Predicated region
    $region22: #{tpu_custom_call.1} parent=1 // pred_check
      _
    $region23: #{tpu_custom_call.1} parent=1 // pred_check_branch
      %58 = sbr.rel (0) target = $region25
    $region24: #{tpu_custom_call.1} parent=1 // pred_region
      %60 = vsyncadd [#allocation9], 0
      %s61 = sshll.u32 %s5, 4
      %s62 = int_to_ptr.hbm [resolvable:$true] %s61
      %s63 = sshll.u32 [#allocation8], 4
      %s64 = int_to_ptr.vmem [resolvable:$true] %s63
      %69 = dma.hbm_to_vmem [thread:$0]  %s62, 1024, %s64, [#allocation9], 64, 64, 4
    $region25: #{tpu_custom_call.1} parent=1 // pred_fallthru
      _
    // Predicated region
    $region26: #{tpu_custom_call.1} parent=1 // pred_check
      _
    $region27: #{tpu_custom_call.1} parent=1 // pred_check_branch
      %71 = sbr.rel (0) target = $region29
    $region28: #{tpu_custom_call.1} parent=1 // pred_region
      _
    $region29: #{tpu_custom_call.1} parent=1 // pred_fallthru
      _
    // Predicated region
    $region30: #{tpu_custom_call.1} parent=1 // pred_check
      _
    $region31: #{tpu_custom_call.1} parent=1 // pred_check_branch
      %73 = sbr.rel (0) target = $region33
    $region32: #{tpu_custom_call.1} parent=1 // pred_region
      %75 = dma.done [#allocation3], 128
    $region33: #{tpu_custom_call.1} parent=1 // pred_fallthru
      _
    // Predicated region
    $region34: #{tpu_custom_call.1} parent=1 // pred_check
      _
    $region35: #{tpu_custom_call.1} parent=1 // pred_check_branch
      %77 = sbr.rel (0) target = $region37
    $region36: #{tpu_custom_call.1} parent=1 // pred_region
      %79 = dma.done [#allocation6], 1024
    $region37: #{tpu_custom_call.1} parent=1 // pred_fallthru
      _
    // Predicated region
    $region38: #{tpu_custom_call.1} parent=1 // pred_check
      _
    $region39: #{tpu_custom_call.1} parent=1 // pred_check_branch
      %81 = sbr.rel (0) target = $region41
    $region40: #{tpu_custom_call.1} parent=1 // pred_region
      %83 = dma.done [#allocation6], 1024
    $region41: #{tpu_custom_call.1} parent=1 // pred_fallthru
      _
    // Predicated region
    $region42: #{tpu_custom_call.1} parent=1 // pred_check
      _
    $region43: #{tpu_custom_call.1} parent=1 // pred_check_branch
      %85 = sbr.rel (0) target = $region45
    $region44: #{tpu_custom_call.1} parent=1 // pred_region
      %87 = dma.done [#allocation9], 1024
    $region45: #{tpu_custom_call.1} parent=1 // pred_fallthru
      _
    %v88 = vld [vmem:[#allocation2] sm:$0xff]
    %v89 = vld [vmem:[#allocation5] sm:$0xf]
    %v90 = vld [vmem:[#allocation5 + $0x4] sm:$0xf]
    %v91 = vld [vmem:[#allocation5 + $0x8] sm:$0xf]
    %v92 = vld [vmem:[#allocation5 + $0xc] sm:$0xf]
    %v93 = vld [vmem:[#allocation5 + $0x10] sm:$0xf]
    %v94 = vld [vmem:[#allocation5 + $0x14] sm:$0xf]
    %v95 = vld [vmem:[#allocation5 + $0x18] sm:$0xf]
    %v96 = vld [vmem:[#allocation5 + $0x1c] sm:$0xf]
    %v97 = vld [vmem:[#allocation5 + $0x20] sm:$0xf]
    %v98 = vld [vmem:[#allocation5 + $0x24] sm:$0xf]
    %v99 = vld [vmem:[#allocation5 + $0x28] sm:$0xf]
    %v100 = vld [vmem:[#allocation5 + $0x2c] sm:$0xf]
    %v101 = vld [vmem:[#allocation5 + $0x30] sm:$0xf]
    %v102 = vld [vmem:[#allocation5 + $0x34] sm:$0xf]
    %v103 = vld [vmem:[#allocation5 + $0x38] sm:$0xf]
    %v104 = vld [vmem:[#allocation5 + $0x3c] sm:$0xf]
    %v105 = vld [vmem:[%s2] sm:$0x1]
    %v106 = vpack.c.bf16 %v88, %v88
    %v108 = vperm.slane %v105, 0
    %v126 = vunpack.c.l.b16 %v89
    %v127 = vunpack.c.l.b16 %v90
    %v128 = vunpack.c.l.b16 %v91
    %v129 = vunpack.c.l.b16 %v92
    %v130 = vunpack.c.l.b16 %v93
    %v131 = vunpack.c.l.b16 %v94
    %v132 = vunpack.c.l.b16 %v95
    %v133 = vunpack.c.l.b16 %v96
    %v134 = vunpack.c.l.b16 %v97
    %v135 = vunpack.c.l.b16 %v98
    %v136 = vunpack.c.l.b16 %v99
    %v137 = vunpack.c.l.b16 %v100
    %v138 = vunpack.c.l.b16 %v101
    %v139 = vunpack.c.l.b16 %v102
    %v140 = vunpack.c.l.b16 %v103
    %v141 = vunpack.c.l.b16 %v104
    %v142 = vpack.c.b16 %v127, %v126
    %v143 = vpack.c.b16 %v129, %v128
    %v144 = vpack.c.b16 %v131, %v130
    %v145 = vpack.c.b16 %v133, %v132
    %v146 = vpack.c.b16 %v135, %v134
    %v147 = vpack.c.b16 %v137, %v136
    %v148 = vpack.c.b16 %v139, %v138
    %v149 = vpack.c.b16 %v141, %v140
    %158 = vmatpush.bf16.msra.mxu0 %v149
    %159 = vmatpush.bf16.msra.mxu0 %v148
    %160 = vmatpush.bf16.msra.mxu0 %v147
    %161 = vmatpush.bf16.msra.mxu0 %v146
    %162 = vmatpush.bf16.msra.mxu0 %v145
    %163 = vmatpush.bf16.msra.mxu0 %v144
    %164 = vmatpush.bf16.msra.mxu0 %v143
    %165 = vmatpush.bf16.msra.mxu0 %v142
    %166 = vmatmul.bf16.gmra.mxu0 %v106
    %v167 = vpop.f32.mrf.mxu0
    %v168 = vadd.f32 %v108, %v167
    %v169 = vpop.f32.mrf.mxu0
    %170 = vdwg.mxu0
    %v171 = vld [vmem:[#allocation7] sm:$0xf]
    %v172 = vld [vmem:[#allocation7 + $0x4] sm:$0xf]
    %v173 = vld [vmem:[#allocation7 + $0x8] sm:$0xf]
    %v174 = vld [vmem:[#allocation7 + $0xc] sm:$0xf]
    %v175 = vld [vmem:[#allocation7 + $0x10] sm:$0xf]
    %v176 = vld [vmem:[#allocation7 + $0x14] sm:$0xf]
    %v177 = vld [vmem:[#allocation7 + $0x18] sm:$0xf]
    %v178 = vld [vmem:[#allocation7 + $0x1c] sm:$0xf]
    %v179 = vld [vmem:[#allocation7 + $0x20] sm:$0xf]
    %v180 = vld [vmem:[#allocation7 + $0x24] sm:$0xf]
    %v181 = vld [vmem:[#allocation7 + $0x28] sm:$0xf]
    %v182 = vld [vmem:[#allocation7 + $0x2c] sm:$0xf]
    %v183 = vld [vmem:[#allocation7 + $0x30] sm:$0xf]
    %v184 = vld [vmem:[#allocation7 + $0x34] sm:$0xf]
    %v185 = vld [vmem:[#allocation7 + $0x38] sm:$0xf]
    %v186 = vld [vmem:[#allocation7 + $0x3c] sm:$0xf]
    %v187 = vld [vmem:[%s4] sm:$0x1]
    %v188 = vmax.f32 %v168, 0.0
    %v189 = vpack.c.bf16 %v188, %v188
    %v191 = vperm.slane %v187, 0
    %v209 = vunpack.c.l.b16 %v171
    %v210 = vunpack.c.l.b16 %v172
    %v211 = vunpack.c.l.b16 %v173
    %v212 = vunpack.c.l.b16 %v174
    %v213 = vunpack.c.l.b16 %v175
    %v214 = vunpack.c.l.b16 %v176
    %v215 = vunpack.c.l.b16 %v177
    %v216 = vunpack.c.l.b16 %v178
    %v217 = vunpack.c.l.b16 %v179
    %v218 = vunpack.c.l.b16 %v180
    %v219 = vunpack.c.l.b16 %v181
    %v220 = vunpack.c.l.b16 %v182
    %v221 = vunpack.c.l.b16 %v183
    %v222 = vunpack.c.l.b16 %v184
    %v223 = vunpack.c.l.b16 %v185
    %v224 = vunpack.c.l.b16 %v186
    %v225 = vpack.c.b16 %v210, %v209
    %v226 = vpack.c.b16 %v212, %v211
    %v227 = vpack.c.b16 %v214, %v213
    %v228 = vpack.c.b16 %v216, %v215
    %v229 = vpack.c.b16 %v218, %v217
    %v230 = vpack.c.b16 %v220, %v219
    %v231 = vpack.c.b16 %v222, %v221
    %v232 = vpack.c.b16 %v224, %v223
    %241 = vmatpush.bf16.msra.mxu0 %v232
    %242 = vmatpush.bf16.msra.mxu0 %v231
    %243 = vmatpush.bf16.msra.mxu0 %v230
    %244 = vmatpush.bf16.msra.mxu0 %v229
    %245 = vmatpush.bf16.msra.mxu0 %v228
    %246 = vmatpush.bf16.msra.mxu0 %v227
    %247 = vmatpush.bf16.msra.mxu0 %v226
    %248 = vmatpush.bf16.msra.mxu0 %v225
    %249 = vmatmul.bf16.gmra.mxu0 %v189
    %v250 = vpop.f32.mrf.mxu0
    %v251 = vadd.f32 %v191, %v250
    %v252 = vpop.f32.mrf.mxu0
    %253 = vdwg.mxu0
    %v254 = vld [vmem:[#allocation8] sm:$0xf]
    %v255 = vld [vmem:[#allocation8 + $0x4] sm:$0xf]
    %v256 = vld [vmem:[#allocation8 + $0x8] sm:$0xf]
    %v257 = vld [vmem:[#allocation8 + $0xc] sm:$0xf]
    %v258 = vld [vmem:[#allocation8 + $0x10] sm:$0xf]
    %v259 = vld [vmem:[#allocation8 + $0x14] sm:$0xf]
    %v260 = vld [vmem:[#allocation8 + $0x18] sm:$0xf]
    %v261 = vld [vmem:[#allocation8 + $0x1c] sm:$0xf]
    %v262 = vld [vmem:[#allocation8 + $0x20] sm:$0xf]
    %v263 = vld [vmem:[#allocation8 + $0x24] sm:$0xf]
    %v264 = vld [vmem:[#allocation8 + $0x28] sm:$0xf]
    %v265 = vld [vmem:[#allocation8 + $0x2c] sm:$0xf]
    %v266 = vld [vmem:[#allocation8 + $0x30] sm:$0xf]
    %v267 = vld [vmem:[#allocation8 + $0x34] sm:$0xf]
    %v268 = vld [vmem:[#allocation8 + $0x38] sm:$0xf]
    %v269 = vld [vmem:[#allocation8 + $0x3c] sm:$0xf]
    %v270 = vld [vmem:[%s6] sm:$0x1]
    %v271 = vmax.f32 %v251, 0.0
    %v272 = vpack.c.bf16 %v271, %v271
    %v274 = vperm.slane %v270, 0
    %v292 = vunpack.c.l.b16 %v254
    %v293 = vunpack.c.l.b16 %v255
    %v294 = vunpack.c.l.b16 %v256
    %v295 = vunpack.c.l.b16 %v257
    %v296 = vunpack.c.l.b16 %v258
    %v297 = vunpack.c.l.b16 %v259
    %v298 = vunpack.c.l.b16 %v260
    %v299 = vunpack.c.l.b16 %v261
    %v300 = vunpack.c.l.b16 %v262
    %v301 = vunpack.c.l.b16 %v263
    %v302 = vunpack.c.l.b16 %v264
    %v303 = vunpack.c.l.b16 %v265
    %v304 = vunpack.c.l.b16 %v266
    %v305 = vunpack.c.l.b16 %v267
    %v306 = vunpack.c.l.b16 %v268
    %v307 = vunpack.c.l.b16 %v269
    %v308 = vpack.c.b16 %v293, %v292
    %v309 = vpack.c.b16 %v295, %v294
    %v310 = vpack.c.b16 %v297, %v296
    %v311 = vpack.c.b16 %v299, %v298
    %v312 = vpack.c.b16 %v301, %v300
    %v313 = vpack.c.b16 %v303, %v302
    %v314 = vpack.c.b16 %v305, %v304
    %v315 = vpack.c.b16 %v307, %v306
    %324 = vmatpush.bf16.msra.mxu0 %v315
    %325 = vmatpush.bf16.msra.mxu0 %v314
    %326 = vmatpush.bf16.msra.mxu0 %v313
    %327 = vmatpush.bf16.msra.mxu0 %v312
    %328 = vmatpush.bf16.msra.mxu0 %v311
    %329 = vmatpush.bf16.msra.mxu0 %v310
    %330 = vmatpush.bf16.msra.mxu0 %v309
    %331 = vmatpush.bf16.msra.mxu0 %v308
    %332 = vmatmul.bf16.gmra.mxu0 %v272
    %v333 = vpop.f32.mrf.mxu0
    %v334 = vadd.f32 %v274, %v333
    %v335 = vpop.f32.mrf.mxu0
    %336 = vdwg.mxu0
    %337 = vst [vmem:[#allocation10] sm:$0xff] %v334
    // Predicated region
    $region46: #{tpu_custom_call.1} parent=1 // pred_check
      _
    $region47: #{tpu_custom_call.1} parent=1 // pred_check_branch
      %339 = sbr.rel (0) target = $region49
    $region48: #{tpu_custom_call.1} parent=1 // pred_region
      %341 = vsyncadd [#allocation4], 0
      %s343 = sshll.u32 [#allocation10], 4
      %s344 = int_to_ptr.vmem [resolvable:$true] %s343
      %s345 = sshll.u32 %s7, 4
      %s346 = int_to_ptr.hbm [resolvable:$true] %s345
      %348 = dma.vmem_to_hbm [thread:$0]  %s344, 128, %s346, [#allocation4]
    $region49: #{tpu_custom_call.1} parent=1 // pred_fallthru
      _
    // Predicated region
    $region50: #{tpu_custom_call.1} parent=1 // pred_check
      _
    $region51: #{tpu_custom_call.1} parent=1 // pred_check_branch
      %350 = sbr.rel (0) target = $region53
    $region52: #{tpu_custom_call.1} parent=1 // pred_region
      %352 = dma.done [#allocation4], 128
    $region53: #{tpu_custom_call.1} parent=1 // pred_fallthru
      _
    %353 = vsyncpa [#allocation3], 1
    %354 = vsyncpa [#allocation6], 1
    %355 = vsyncpa [#allocation9], 1
    %356 = vsyncpa [#allocation4], 1

// kernel: tpu_custom_call.1
$region0: #{tpu_custom_call.1}
  #allocation0 [shape = 'u32[]', space=smem, size = 0x4, offset = 0x4, fixed_abs, tag = 'smem constant byte address 0x4 - core index']
  #allocation1 [shape = 'u32[72,128]{1,0:T(1,128)}', space=vmem, size = 0x9000, scoped, tag = 'internal scratch']
  %s0 = inlined_call_operand.hbm [shape: f32[8,128], index: 0, kind: input, shape index: {}]
  %s1 = inlined_call_operand.hbm [shape: bf16[128,128], index: 1, kind: input, shape index: {}]
  %s2 = inlined_call_operand.vmem [shape: f32[1,128], index: 2, kind: input, shape index: {}]
  %s3 = inlined_call_operand.hbm [shape: bf16[128,128], index: 3, kind: input, shape index: {}]
  %s4 = inlined_call_operand.vmem [shape: f32[1,128], index: 4, kind: input, shape index: {}]
  %s5 = inlined_call_operand.hbm [shape: bf16[128,128], index: 5, kind: input, shape index: {}]
  %s6 = inlined_call_operand.vmem [shape: f32[1,128], index: 6, kind: input, shape index: {}]
  %s7 = inlined_call_operand.hbm [shape: f32[8,128], index: 7, kind: output, shape index: {}]
  %s8 = sld [smem:[#allocation0]]
  $region54: #{tpu_custom_call.1} parent=0
    _
  %s10 = ssub.s32 1, %s8
  %s11 = scalar_select 0, %s10, %s8
  $region1: #{tpu_custom_call.1} parent=0
    #allocation2 [shape = 'u8[4096]{0}', space=vmem, size = 0x1000, scoped, tag = 'input window, operand 0, single buffered']
    #allocation3 [shape = 's32[1]{0}', space=sflag, size = 0x4, scoped, tag = 'scoped memory for tpu_custom_call.1']
    #allocation4 [shape = 's32[1]{0}', space=sflag, size = 0x4, scoped, tag = 'scoped memory for tpu_custom_call.1']
    #allocation5 [shape = 'u8[32768]{0}', space=vmem, size = 0x8000, scoped, tag = 'input window, operand 1, single buffered']
    #allocation6 [shape = 's32[1]{0}', space=sflag, size = 0x4, scoped, tag = 'scoped memory for tpu_custom_call.1']
    #allocation7 [shape = 'u8[32768]{0}', space=vmem, size = 0x8000, scoped, tag = 'input window, operand 3, single buffered']
    #allocation8 [shape = 'u8[32768]{0}', space=vmem, size = 0x8000, scoped, tag = 'input window, operand 5, single buffered']
    #allocation9 [shape = 's32[1]{0}', space=sflag, size = 0x4, scoped, tag = 'scoped memory for tpu_custom_call.1']
    #allocation10 [shape = 'u8[4096]{0}', space=vmem, size = 0x1000, scoped, tag = 'output window, operand 0, single buffered']
    %12 = vsyncpa [#allocation3], 0
    %13 = vsyncpa [#allocation6], 0
    %14 = vsyncpa [#allocation9], 0
    %15 = vsyncpa [#allocation4], 0
    // Predicated region
    $region2: #{tpu_custom_call.1} parent=1 // pred_check
      _
    $region3: #{tpu_custom_call.1} parent=1 // pred_check_branch
      %17 = sbr.rel (0) target = $region5
    $region4: #{tpu_custom_call.1} parent=1 // pred_region
      %19 = vsyncadd [#allocation3], 0
      %s21 = sshll.u32 %s0, 4
      %s22 = int_to_ptr.hbm [resolvable:$true] %s21
      %s23 = sshll.u32 [#allocation2], 4
      %s24 = int_to_ptr.vmem [resolvable:$true] %s23
      %26 = dma.hbm_to_vmem [thread:$0]  %s22, 128, %s24, [#allocation3]
    $region5: #{tpu_custom_call.1} parent=1 // pred_fallthru
      _
    // Predicated region
    $region6: #{tpu_custom_call.1} parent=1 // pred_check
      _
    $region7: #{tpu_custom_call.1} parent=1 // pred_check_branch
      %28 = sbr.rel (0) target = $region9
    $region8: #{tpu_custom_call.1} parent=1 // pred_region
      %30 = vsyncadd [#allocation6], 0
      %s31 = sshll.u32 %s1, 4
      %s32 = int_to_ptr.hbm [resolvable:$true] %s31
      %s33 = sshll.u32 [#allocation5], 4
      %s34 = int_to_ptr.vmem [resolvable:$true] %s33
      %39 = dma.hbm_to_vmem [thread:$0]  %s32, 1024, %s34, [#allocation6], 64, 64, 4
    $region9: #{tpu_custom_call.1} parent=1 // pred_fallthru
      _
    // Predicated region
    $region10: #{tpu_custom_call.1} parent=1 // pred_check
      _
    $region11: #{tpu_custom_call.1} parent=1 // pred_check_branch
      %41 = sbr.rel (0) target = $region13
    $region12: #{tpu_custom_call.1} parent=1 // pred_region
      _
    $region13: #{tpu_custom_call.1} parent=1 // pred_fallthru
      _
    // Predicated region
    $region14: #{tpu_custom_call.1} parent=1 // pred_check
      _
    $region15: #{tpu_custom_call.1} parent=1 // pred_check_branch
      %43 = sbr.rel (0) target = $region17
    $region16: #{tpu_custom_call.1} parent=1 // pred_region
      %45 = vsyncadd [#allocation6], 0
      %s46 = sshll.u32 %s3, 4
      %s47 = int_to_ptr.hbm [resolvable:$true] %s46
      %s48 = sshll.u32 [#allocation7], 4
      %s49 = int_to_ptr.vmem [resolvable:$true] %s48
      %54 = dma.hbm_to_vmem [thread:$0]  %s47, 1024, %s49, [#allocation6], 64, 64, 4
    $region17: #{tpu_custom_call.1} parent=1 // pred_fallthru
      _
    // Predicated region
    $region18: #{tpu_custom_call.1} parent=1 // pred_check
      _
    $region19: #{tpu_custom_call.1} parent=1 // pred_check_branch
      %56 = sbr.rel (0) target = $region21
    $region20: #{tpu_custom_call.1} parent=1 // pred_region
      _
    $region21: #{tpu_custom_call.1} parent=1 // pred_fallthru
      _
    // Predicated region
    $region22: #{tpu_custom_call.1} parent=1 // pred_check
      _
    $region23: #{tpu_custom_call.1} parent=1 // pred_check_branch
      %58 = sbr.rel (0) target = $region25
    $region24: #{tpu_custom_call.1} parent=1 // pred_region
      %60 = vsyncadd [#allocation9], 0
      %s61 = sshll.u32 %s5, 4
      %s62 = int_to_ptr.hbm [resolvable:$true] %s61
      %s63 = sshll.u32 [#allocation8], 4
      %s64 = int_to_ptr.vmem [resolvable:$true] %s63
      %69 = dma.hbm_to_vmem [thread:$0]  %s62, 1024, %s64, [#allocation9], 64, 64, 4
    $region25: #{tpu_custom_call.1} parent=1 // pred_fallthru
      _
    // Predicated region
    $region26: #{tpu_custom_call.1} parent=1 // pred_check
      _
    $region27: #{tpu_custom_call.1} parent=1 // pred_check_branch
      %71 = sbr.rel (0) target = $region29
    $region28: #{tpu_custom_call.1} parent=1 // pred_region
      _
    $region29: #{tpu_custom_call.1} parent=1 // pred_fallthru
      _
    // Predicated region
    $region30: #{tpu_custom_call.1} parent=1 // pred_check
      _
    $region31: #{tpu_custom_call.1} parent=1 // pred_check_branch
      %73 = sbr.rel (0) target = $region33
    $region32: #{tpu_custom_call.1} parent=1 // pred_region
      %75 = dma.done [#allocation3], 128
    $region33: #{tpu_custom_call.1} parent=1 // pred_fallthru
      _
    // Predicated region
    $region34: #{tpu_custom_call.1} parent=1 // pred_check
      _
    $region35: #{tpu_custom_call.1} parent=1 // pred_check_branch
      %77 = sbr.rel (0) target = $region37
    $region36: #{tpu_custom_call.1} parent=1 // pred_region
      %79 = dma.done [#allocation6], 1024
    $region37: #{tpu_custom_call.1} parent=1 // pred_fallthru
      _
    // Predicated region
    $region38: #{tpu_custom_call.1} parent=1 // pred_check
      _
    $region39: #{tpu_custom_call.1} parent=1 // pred_check_branch
      %81 = sbr.rel (0) target = $region41
    $region40: #{tpu_custom_call.1} parent=1 // pred_region
      %83 = dma.done [#allocation6], 1024
    $region41: #{tpu_custom_call.1} parent=1 // pred_fallthru
      _
    // Predicated region
    $region42: #{tpu_custom_call.1} parent=1 // pred_check
      _
    $region43: #{tpu_custom_call.1} parent=1 // pred_check_branch
      %85 = sbr.rel (0) target = $region45
    $region44: #{tpu_custom_call.1} parent=1 // pred_region
      %87 = dma.done [#allocation9], 1024
    $region45: #{tpu_custom_call.1} parent=1 // pred_fallthru
      _
    %v88 = vld [vmem:[#allocation2] sm:$0xff]
    %v89 = vld [vmem:[#allocation5] sm:$0xf]
    %v90 = vld [vmem:[#allocation5 + $0x4] sm:$0xf]
    %v91 = vld [vmem:[#allocation5 + $0x8] sm:$0xf]
    %v92 = vld [vmem:[#allocation5 + $0xc] sm:$0xf]
    %v93 = vld [vmem:[#allocation5 + $0x10] sm:$0xf]
    %v94 = vld [vmem:[#allocation5 + $0x14] sm:$0xf]
    %v95 = vld [vmem:[#allocation5 + $0x18] sm:$0xf]
    %v96 = vld [vmem:[#allocation5 + $0x1c] sm:$0xf]
    %v97 = vld [vmem:[#allocation5 + $0x20] sm:$0xf]
    %v98 = vld [vmem:[#allocation5 + $0x24] sm:$0xf]
    %v99 = vld [vmem:[#allocation5 + $0x28] sm:$0xf]
    %v100 = vld [vmem:[#allocation5 + $0x2c] sm:$0xf]
    %v101 = vld [vmem:[#allocation5 + $0x30] sm:$0xf]
    %v102 = vld [vmem:[#allocation5 + $0x34] sm:$0xf]
    %v103 = vld [vmem:[#allocation5 + $0x38] sm:$0xf]
    %v104 = vld [vmem:[#allocation5 + $0x3c] sm:$0xf]
    %v105 = vld [vmem:[%s2] sm:$0x1]
    %v106 = vpack.c.bf16 %v88, %v88
    %v108 = vperm.slane %v105, 0
    %v126 = vunpack.c.l.b16 %v89
    %v127 = vunpack.c.l.b16 %v90
    %v128 = vunpack.c.l.b16 %v91
    %v129 = vunpack.c.l.b16 %v92
    %v130 = vunpack.c.l.b16 %v93
    %v131 = vunpack.c.l.b16 %v94
    %v132 = vunpack.c.l.b16 %v95
    %v133 = vunpack.c.l.b16 %v96
    %v134 = vunpack.c.l.b16 %v97
    %v135 = vunpack.c.l.b16 %v98
    %v136 = vunpack.c.l.b16 %v99
    %v137 = vunpack.c.l.b16 %v100
    %v138 = vunpack.c.l.b16 %v101
    %v139 = vunpack.c.l.b16 %v102
    %v140 = vunpack.c.l.b16 %v103
    %v141 = vunpack.c.l.b16 %v104
    %v142 = vpack.c.b16 %v127, %v126
    %v143 = vpack.c.b16 %v129, %v128
    %v144 = vpack.c.b16 %v131, %v130
    %v145 = vpack.c.b16 %v133, %v132
    %v146 = vpack.c.b16 %v135, %v134
    %v147 = vpack.c.b16 %v137, %v136
    %v148 = vpack.c.b16 %v139, %v138
    %v149 = vpack.c.b16 %v141, %v140
    %158 = vmatpush.bf16.msra.mxu0 %v149
    %159 = vmatpush.bf16.msra.mxu0 %v148
    %160 = vmatpush.bf16.msra.mxu0 %v147
    %161 = vmatpush.bf16.msra.mxu0 %v146
    %162 = vmatpush.bf16.msra.mxu0 %v145
    %163 = vmatpush.bf16.msra.mxu0 %v144
    %164 = vmatpush.bf16.msra.mxu0 %v143
    %165 = vmatpush.bf16.msra.mxu0 %v142
    %166 = vmatmul.bf16.gmra.mxu0 %v106
    %v167 = vpop.f32.mrf.mxu0
    %v168 = vadd.f32 %v108, %v167
    %v169 = vpop.f32.mrf.mxu0
    %170 = vdwg.mxu0
    %v171 = vld [vmem:[#allocation7] sm:$0xf]
    %v172 = vld [vmem:[#allocation7 + $0x4] sm:$0xf]
    %v173 = vld [vmem:[#allocation7 + $0x8] sm:$0xf]
    %v174 = vld [vmem:[#allocation7 + $0xc] sm:$0xf]
    %v175 = vld [vmem:[#allocation7 + $0x10] sm:$0xf]
    %v176 = vld [vmem:[#allocation7 + $0x14] sm:$0xf]
    %v177 = vld [vmem:[#allocation7 + $0x18] sm:$0xf]
    %v178 = vld [vmem:[#allocation7 + $0x1c] sm:$0xf]
    %v179 = vld [vmem:[#allocation7 + $0x20] sm:$0xf]
    %v180 = vld [vmem:[#allocation7 + $0x24] sm:$0xf]
    %v181 = vld [vmem:[#allocation7 + $0x28] sm:$0xf]
    %v182 = vld [vmem:[#allocation7 + $0x2c] sm:$0xf]
    %v183 = vld [vmem:[#allocation7 + $0x30] sm:$0xf]
    %v184 = vld [vmem:[#allocation7 + $0x34] sm:$0xf]
    %v185 = vld [vmem:[#allocation7 + $0x38] sm:$0xf]
    %v186 = vld [vmem:[#allocation7 + $0x3c] sm:$0xf]
    %v187 = vld [vmem:[%s4] sm:$0x1]
    %v188 = vmax.f32 %v168, 0.0
    %v189 = vpack.c.bf16 %v188, %v188
    %v191 = vperm.slane %v187, 0
    %v209 = vunpack.c.l.b16 %v171
    %v210 = vunpack.c.l.b16 %v172
    %v211 = vunpack.c.l.b16 %v173
    %v212 = vunpack.c.l.b16 %v174
    %v213 = vunpack.c.l.b16 %v175
    %v214 = vunpack.c.l.b16 %v176
    %v215 = vunpack.c.l.b16 %v177
    %v216 = vunpack.c.l.b16 %v178
    %v217 = vunpack.c.l.b16 %v179
    %v218 = vunpack.c.l.b16 %v180
    %v219 = vunpack.c.l.b16 %v181
    %v220 = vunpack.c.l.b16 %v182
    %v221 = vunpack.c.l.b16 %v183
    %v222 = vunpack.c.l.b16 %v184
    %v223 = vunpack.c.l.b16 %v185
    %v224 = vunpack.c.l.b16 %v186
    %v225 = vpack.c.b16 %v210, %v209
    %v226 = vpack.c.b16 %v212, %v211
    %v227 = vpack.c.b16 %v214, %v213
    %v228 = vpack.c.b16 %v216, %v215
    %v229 = vpack.c.b16 %v218, %v217
    %v230 = vpack.c.b16 %v220, %v219
    %v231 = vpack.c.b16 %v222, %v221
    %v232 = vpack.c.b16 %v224, %v223
    %241 = vmatpush.bf16.msra.mxu0 %v232
    %242 = vmatpush.bf16.msra.mxu0 %v231
    %243 = vmatpush.bf16.msra.mxu0 %v230
    %244 = vmatpush.bf16.msra.mxu0 %v229
    %245 = vmatpush.bf16.msra.mxu0 %v228
    %246 = vmatpush.bf16.msra.mxu0 %v227
    %247 = vmatpush.bf16.msra.mxu0 %v226
    %248 = vmatpush.bf16.msra.mxu0 %v225
    %249 = vmatmul.bf16.gmra.mxu0 %v189
    %v250 = vpop.f32.mrf.mxu0
    %v251 = vadd.f32 %v191, %v250
    %v252 = vpop.f32.mrf.mxu0
    %253 = vdwg.mxu0
    %v254 = vld [vmem:[#allocation8] sm:$0xf]
    %v255 = vld [vmem:[#allocation8 + $0x4] sm:$0xf]
    %v256 = vld [vmem:[#allocation8 + $0x8] sm:$0xf]
    %v257 = vld [vmem:[#allocation8 + $0xc] sm:$0xf]
    %v258 = vld [vmem:[#allocation8 + $0x10] sm:$0xf]
    %v259 = vld [vmem:[#allocation8 + $0x14] sm:$0xf]
    %v260 = vld [vmem:[#allocation8 + $0x18] sm:$0xf]
    %v261 = vld [vmem:[#allocation8 + $0x1c] sm:$0xf]
    %v262 = vld [vmem:[#allocation8 + $0x20] sm:$0xf]
    %v263 = vld [vmem:[#allocation8 + $0x24] sm:$0xf]
    %v264 = vld [vmem:[#allocation8 + $0x28] sm:$0xf]
    %v265 = vld [vmem:[#allocation8 + $0x2c] sm:$0xf]
    %v266 = vld [vmem:[#allocation8 + $0x30] sm:$0xf]
    %v267 = vld [vmem:[#allocation8 + $0x34] sm:$0xf]
    %v268 = vld [vmem:[#allocation8 + $0x38] sm:$0xf]
    %v269 = vld [vmem:[#allocation8 + $0x3c] sm:$0xf]
    %v270 = vld [vmem:[%s6] sm:$0x1]
    %v271 = vmax.f32 %v251, 0.0
    %v272 = vpack.c.bf16 %v271, %v271
    %v274 = vperm.slane %v270, 0
    %v292 = vunpack.c.l.b16 %v254
    %v293 = vunpack.c.l.b16 %v255
    %v294 = vunpack.c.l.b16 %v256
    %v295 = vunpack.c.l.b16 %v257
    %v296 = vunpack.c.l.b16 %v258
    %v297 = vunpack.c.l.b16 %v259
    %v298 = vunpack.c.l.b16 %v260
    %v299 = vunpack.c.l.b16 %v261
    %v300 = vunpack.c.l.b16 %v262
    %v301 = vunpack.c.l.b16 %v263
    %v302 = vunpack.c.l.b16 %v264
    %v303 = vunpack.c.l.b16 %v265
    %v304 = vunpack.c.l.b16 %v266
    %v305 = vunpack.c.l.b16 %v267
    %v306 = vunpack.c.l.b16 %v268
    %v307 = vunpack.c.l.b16 %v269
    %v308 = vpack.c.b16 %v293, %v292
    %v309 = vpack.c.b16 %v295, %v294
    %v310 = vpack.c.b16 %v297, %v296
    %v311 = vpack.c.b16 %v299, %v298
    %v312 = vpack.c.b16 %v301, %v300
    %v313 = vpack.c.b16 %v303, %v302
    %v314 = vpack.c.b16 %v305, %v304
    %v315 = vpack.c.b16 %v307, %v306
    %324 = vmatpush.bf16.msra.mxu0 %v315
    %325 = vmatpush.bf16.msra.mxu0 %v314
    %326 = vmatpush.bf16.msra.mxu0 %v313
    %327 = vmatpush.bf16.msra.mxu0 %v312
    %328 = vmatpush.bf16.msra.mxu0 %v311
    %329 = vmatpush.bf16.msra.mxu0 %v310
    %330 = vmatpush.bf16.msra.mxu0 %v309
    %331 = vmatpush.bf16.msra.mxu0 %v308
    %332 = vmatmul.bf16.gmra.mxu0 %v272
    %v333 = vpop.f32.mrf.mxu0
    %v334 = vadd.f32 %v274, %v333
    %v335 = vpop.f32.mrf.mxu0
    %336 = vdwg.mxu0
    %337 = vst [vmem:[#allocation10] sm:$0xff] %v334
    // Predicated region
    $region46: #{tpu_custom_call.1} parent=1 // pred_check
      _
    $region47: #{tpu_custom_call.1} parent=1 // pred_check_branch
      %339 = sbr.rel (0) target = $region49
    $region48: #{tpu_custom_call.1} parent=1 // pred_region
      %341 = vsyncadd [#allocation4], 0
      %s343 = sshll.u32 [#allocation10], 4
      %s344 = int_to_ptr.vmem [resolvable:$true] %s343
      %s345 = sshll.u32 %s7, 4
      %s346 = int_to_ptr.hbm [resolvable:$true] %s345
      %348 = dma.vmem_to_hbm [thread:$0]  %s344, 128, %s346, [#allocation4]
    $region49: #{tpu_custom_call.1} parent=1 // pred_fallthru
      _
    // Predicated region
    $region50: #{tpu_custom_call.1} parent=1 // pred_check
      _
    $region51: #{tpu_custom_call.1} parent=1 // pred_check_branch
      %350 = sbr.rel (0) target = $region53
    $region52: #{tpu_custom_call.1} parent=1 // pred_region
      %352 = dma.done [#allocation4], 128
    $region53: #{tpu_custom_call.1} parent=1 // pred_fallthru
      _
    %353 = vsyncpa [#allocation3], 1
    %354 = vsyncpa [#allocation6], 1
    %355 = vsyncpa [#allocation9], 1
    %356 = vsyncpa [#allocation4], 1

</llo_original>
